<compile_context>
chip_gen: v6e
topology: v6e:2x2x1
jax: 0.10.0
libtpu: 0.0.40
codegen_flags: <defaults>
</compile_context>

<pallas_src>
import math

import jax
import jax.numpy as jnp
from jax.experimental import pallas as pl
from jax.experimental.pallas import tpu as pltpu


_LANE = 128           # class-dim padding granularity (lane-dense stores)
_MAX_TM = 256         # row (M) tile cap       (v7x-friendly)
_MAX_TN = 512         # class (N) tile cap     (v7x-friendly)
_MAX_TK = 2048        # d_model (K) tile cap
_SMALL_M_MAX = 2048   # max rows handled by the single-step small path
_SMALL_W_BYTES = 2 << 20   # max stacked (max-padded) weight bytes for small path
_VMEM_CAP = 48 << 20       # stay under v7x's 64 MiB physical VMEM


def _round_up(x, m):
    return ((x + m - 1) // m) * m


# ----------------------------------------------------------------------------
# Small-problem fast path: every head in ONE grid step (one launch, one step).
# ----------------------------------------------------------------------------
def _small_fused_kernel(x_ref, w_ref, b_ref, o_ref):
    # x: (H, M, D) bf16, w: (H, D, Cp) bf16, b: (H, 1, Cp) f32
    acc = jnp.einsum("hmd,hdc->hmc", x_ref[...], w_ref[...],
                     preferred_element_type=jnp.float32)
    o_ref[...] = (acc + b_ref[...]).astype(o_ref.dtype)


def fused_heads_matmul_small(x_stacked, w_stacked, b_stacked, *,
                             out_dtype=jnp.float32):
    H, M, D = x_stacked.shape
    _, _, Cp = w_stacked.shape
    out_bytes = jnp.dtype(out_dtype).itemsize
    total = int(x_stacked.size * 2 + w_stacked.size * 2
                + b_stacked.size * 4 + H * M * Cp * out_bytes)
    vmem_limit = int(min(max(2 * total + (4 << 20), 16 << 20), _VMEM_CAP))

    return pl.pallas_call(
        _small_fused_kernel,
        out_shape=jax.ShapeDtypeStruct((H, M, Cp), out_dtype),
        grid_spec=pltpu.PrefetchScalarGridSpec(
            num_scalar_prefetch=0,
            grid=(1,),
            in_specs=[
                pl.BlockSpec((H, M, D), lambda i: (0, 0, 0)),
                pl.BlockSpec((H, D, Cp), lambda i: (0, 0, 0)),
                pl.BlockSpec((H, 1, Cp), lambda i: (0, 0, 0)),
            ],
            out_specs=pl.BlockSpec((H, M, Cp), lambda i: (0, 0, 0)),
        ),
        compiler_params=pltpu.CompilerParams(
            dimension_semantics=("arbitrary",),
            vmem_limit_bytes=vmem_limit,
        ),
        cost_estimate=pl.CostEstimate(
            flops=int(2 * H * M * D * Cp), transcendentals=0,
            bytes_accessed=total),
    )(x_stacked, w_stacked, b_stacked)


# ----------------------------------------------------------------------------
# Tiled path: per-head padding, concatenated class dim, scalar-prefetched
# head table, (m, n, k) tiling with an f32 VMEM accumulator.
# ----------------------------------------------------------------------------
def _tiled_kernel(head_ref, x_ref, w_ref, b_ref, o_ref, acc_ref):
    # head_ref (SMEM scalar-prefetch) is only consumed by the index_maps.
    del head_ref
    k = pl.program_id(2)

    @pl.when(k == 0)
    def _():
        acc_ref[...] = jnp.zeros_like(acc_ref)

    acc_ref[...] += jnp.dot(x_ref[...], w_ref[...],
                            preferred_element_type=jnp.float32)

    @pl.when(k == pl.num_programs(2) - 1)
    def _():
        o_ref[...] = (acc_ref[...] + b_ref[...]).astype(o_ref.dtype)


def fused_heads_matmul_tiled(x_stacked, w_cat, b_cat, head_of_tile, *,
                             tn, tm=None, tk=None, out_dtype=jnp.float32):
    """out[:, off_h:off_h+Cp_h] = x_stacked[h] @ w_cat[:, off_h:off_h+Cp_h] + b.

    x_stacked:    (H, M, D)    bf16   (query rows, one block per head)
    w_cat:        (D, Ctot)    bf16   (per-head weights padded to a multiple
                                       of tn, concatenated along the class dim)
    b_cat:        (1, Ctot)    f32
    head_of_tile: (Ctot//tn,)  int32  (scalar prefetch: head owning column tile)
    returns       (M, Ctot)    out_dtype
    """
    H, M, D = x_stacked.shape
    _, Ctot = w_cat.shape
    assert Ctot % tn == 0
    n_tiles = Ctot // tn

    if tm is None:
        tm = M if M <= _MAX_TM else _MAX_TM
    if tk is None:
        tk = D
        if D > _MAX_TK:
            for cand in (_MAX_TK, 1024, 512):   # only tile K when it divides D
                if D % cand == 0:
                    tk = cand
                    break
    m_tiles = pl.cdiv(M, tm)
    k_tiles = pl.cdiv(D, tk)

    out_bytes = jnp.dtype(out_dtype).itemsize
    # double-buffered in/out blocks + resident accumulator scratch
    block_bytes = (2 * (tm * tk * 2 + tk * tn * 2 + tn * 4
                        + tm * tn * out_bytes) + tm * tn * 4)
    vmem_limit = int(min(max(2 * block_bytes + (4 << 20), 16 << 20), _VMEM_CAP))

    cost = pl.CostEstimate(
        flops=int(2 * M * D * Ctot),
        transcendentals=0,
        bytes_accessed=int(n_tiles * M * D * 2 + m_tiles * D * Ctot * 2
                           + m_tiles * Ctot * 4 + M * Ctot * out_bytes),
    )

    return pl.pallas_call(
        _tiled_kernel,
        out_shape=jax.ShapeDtypeStruct((M, Ctot), out_dtype),
        grid_spec=pltpu.PrefetchScalarGridSpec(
            num_scalar_prefetch=1,
            grid=(m_tiles, n_tiles, k_tiles),
            in_specs=[
                # x rows for the head owning column tile n
                pl.BlockSpec((pl.Squeezed(), tm, tk),
                             lambda m, n, k, head: (head[n], m, k)),
                # weight column tile
                pl.BlockSpec((tk, tn), lambda m, n, k, head: (k, n)),
                # bias column tile
                pl.BlockSpec((1, tn), lambda m, n, k, head: (0, n)),
            ],
            out_specs=pl.BlockSpec((tm, tn), lambda m, n, k, head: (m, n)),
            scratch_shapes=[pltpu.VMEM((tm, tn), jnp.float32)],
        ),
        compiler_params=pltpu.CompilerParams(
            dimension_semantics=("parallel", "parallel", "arbitrary"),
            vmem_limit_bytes=vmem_limit,
        ),
        cost_estimate=cost,
    )(head_of_tile, x_stacked, w_cat, b_cat)


def _pack_heads_concat(w_list, b_list, tn):
    """Pad each head's (D, C_h) weight / (C_h,) bias with zeros to a multiple
    of tn and concatenate along the class dim.  Returns bf16 weights, f32 bias
    (1, Ctot), the int32 head_of_tile table and per-head column offsets."""
    w_pad, b_pad, head_of_tile, offsets = [], [], [], []
    off = 0
    for h, (w, b) in enumerate(zip(w_list, b_list)):
        c = w.shape[1]
        cp = _round_up(c, tn)
        w_pad.append(jnp.pad(w, ((0, 0), (0, cp - c))))
        b_pad.append(jnp.pad(b, (0, cp - c)))
        head_of_tile += [h] * (cp // tn)
        offsets.append(off)
        off += cp
    w_cat = jnp.concatenate(w_pad, axis=1).astype(jnp.bfloat16)
    b_cat = jnp.concatenate(b_pad)[None, :].astype(jnp.float32)
    return w_cat, b_cat, jnp.asarray(head_of_tile, jnp.int32), offsets


# ----------------------------------------------------------------------------
# Module wrapper (forward-pass parity with the PyTorch VisualCLSHead).
# ----------------------------------------------------------------------------
class VisualCLSHeadPallas:
    """JAX/Pallas re-implementation of VisualCLSHead (forward only).

    NOTE: like the PyTorch module, num_a_queries is accepted but unused by
    forward — every head (including action) reads num_v_queries query tokens.
    """

    def __init__(self, num_class, d_model, key, *, out_dtype=jnp.float32,
                 allow_small_path=True):
        self.d_model = d_model
        self.out_dtype = out_dtype
        if isinstance(num_class, (list, tuple)):
            self.include_verb_noun = True
            self.head_names = ("verb", "noun", "action")
            class_counts = list(num_class)
        else:
            self.include_verb_noun = False
            self.head_names = ("action",)
            class_counts = [num_class]
        self.class_counts = class_counts
        H = len(self.head_names)

        keys = jax.random.split(key, H)
        self.params_f32 = {}
        for name, k, c in zip(self.head_names, keys, class_counts):
            self.params_f32[name] = self._init_linear(k, d_model, c)
        w_list = [self.params_f32[n][0] for n in self.head_names]
        b_list = [self.params_f32[n][1] for n in self.head_names]

        # ---- tiled-path packing: per-head padding, concatenated class dim ----
        self.tn = min(_MAX_TN, _round_up(max(class_counts), _LANE))
        (self.w_cat, self.b_cat,
         self.head_of_tile, self.col_offsets) = _pack_heads_concat(
            w_list, b_list, self.tn)

        # ---- small-path packing: stacked, padded to the global max (only
        #      built when that padding is guaranteed cheap) ----
        cp_small = _round_up(max(class_counts), _LANE)
        self.small_ok = (allow_small_path
                         and d_model <= 1024
                         and H * cp_small * d_model * 2 <= _SMALL_W_BYTES)
        if self.small_ok:
            self.cp_small = cp_small
            self.w_small = jnp.stack(
                [jnp.pad(w, ((0, 0), (0, cp_small - w.shape[1])))
                 for w in w_list]).astype(jnp.bfloat16)
            self.b_small = jnp.stack(
                [jnp.pad(b, (0, cp_small - b.shape[0]))
                 for b in b_list])[:, None, :].astype(jnp.float32)

    @staticmethod
    def _init_linear(key, d_in, d_out):
        # nn.Linear-style uniform(-1/sqrt(d_in), +1/sqrt(d_in)); weight stored
        # already transposed as (d_in, d_out) so the kernel does x @ W.
        kw, kb = jax.random.split(key)
        bound = 1.0 / math.sqrt(d_in)
        w = jax.random.uniform(kw, (d_in, d_out), jnp.float32, -bound, bound)
        b = jax.random.uniform(kb, (d_out,), jnp.float32, -bound, bound)
        return w, b

    def __call__(self, x, num_v_queries, num_a_queries):
        del num_a_queries  # unused in forward (parity with the PyTorch module)
        B, S, D = x.shape
        H = len(self.head_names)
        nvq = num_v_queries

        # The verb / noun / action query blocks are the last H*nvq tokens;
        # restack as (H, B*nvq, D).  Row order per head is b*nvq + q, matching
        # torch.flatten(start_dim=0, end_dim=1).
        # TODO(synk): fuse this restack/cast into the kernel via a
        # scalar-prefetched row-offset index_map to avoid the extra HBM copy.
        x_q = x[:, S - H * nvq:, :]
        x_stacked = (x_q.reshape(B, H, nvq, D)
                        .transpose(1, 0, 2, 3)
                        .reshape(H, B * nvq, D)
                        .astype(jnp.bfloat16))
        M = B * nvq

        if self.small_ok and M <= _SMALL_M_MAX:
            out = fused_heads_matmul_small(
                x_stacked, self.w_small, self.b_small, out_dtype=self.out_dtype)
            preds = {name: out[i, :, :c]
                     for i, (name, c) in enumerate(zip(self.head_names,
                                                       self.class_counts))}
        else:
            out = fused_heads_matmul_tiled(
                x_stacked, self.w_cat, self.b_cat, self.head_of_tile,
                tn=self.tn, out_dtype=self.out_dtype)
            preds = {name: out[:, off:off + c]
                     for name, c, off in zip(self.head_names,
                                             self.class_counts,
                                             self.col_offsets)}

        if self.include_verb_noun:
            return (preds["verb"], preds["noun"], preds["action"], None)
        return (None, None, preds["action"], None)


def _reference(x, params_f32, head_names, num_v_queries):
    """Pure-JAX (f32) reference matching the PyTorch forward."""
    B, S, D = x.shape
    H = len(head_names)
    nvq = num_v_queries
    out = {}
    for i, name in enumerate(head_names):
        start = S - (H - i) * nvq
        w, b = params_f32[name]
        out[name] = x[:, start:start + nvq].reshape(-1, D) @ w + b
    return out


if __name__ == "__main__":
    key = jax.random.PRNGKey(0)
    k_x, k_params, k_params1, k_params2, k_direct = jax.random.split(key, 5)

    B = 2               # batch
    d_model = 32        # hidden size
    num_v_queries = 4   # visual queries per head
    num_a_queries = 4   # unused by forward (signature parity with PyTorch)
    num_class = [8, 16, 24]      # verb / noun / action class counts
    S = 3 * num_v_queries + 2    # prefix tokens + 3 query blocks

    x = jax.random.normal(k_x, (B, S, d_model), jnp.float32)

    # ---- multi-head (verb / noun / action), small fast path ----
    head_module = VisualCLSHeadPallas(num_class, d_model, k_params)
    assert head_module.small_ok
    verb, noun, action, extra = head_module(x, num_v_queries, num_a_queries)
    jax.block_until_ready((verb, noun, action))
    ref = _reference(x, head_module.params_f32, head_module.head_names,
                     num_v_queries)
    assert verb.shape == (B * num_v_queries, num_class[0])
    assert noun.shape == (B * num_v_queries, num_class[1])
    assert action.shape == (B * num_v_queries, num_class[2])
    assert extra is None
    assert jnp.allclose(verb, ref["verb"], atol=5e-2, rtol=5e-2)
    assert jnp.allclose(noun, ref["noun"], atol=5e-2, rtol=5e-2)
    assert jnp.allclose(action, ref["action"], atol=5e-2, rtol=5e-2)

    # ---- multi-head, forced tiled path (per-head padding + scalar prefetch) --
    head_tiled = VisualCLSHeadPallas(num_class, d_model, k_params2,
                                     allow_small_path=False)
    assert not head_tiled.small_ok
    v_t, n_t, a_t, _ = head_tiled(x, num_v_queries, num_a_queries)
    jax.block_until_ready((v_t, n_t, a_t))
    ref_t = _reference(x, head_tiled.params_f32, head_tiled.head_names,
                       num_v_queries)
    assert jnp.allclose(v_t, ref_t["verb"], atol=5e-2, rtol=5e-2)
    assert jnp.allclose(n_t, ref_t["noun"], atol=5e-2, rtol=5e-2)
    assert jnp.allclose(a_t, ref_t["action"], atol=5e-2, rtol=5e-2)

    # ---- single-head (action only) path ----
    head_single = VisualCLSHeadPallas(num_class[2], d_model, k_params1)
    v2, n2, a2, _ = head_single(x, num_v_queries, num_a_queries)
    jax.block_until_ready(a2)
    ref2 = _reference(x, head_single.params_f32, head_single.head_names,
                      num_v_queries)
    assert v2 is None and n2 is None
    assert a2.shape == (B * num_v_queries, num_class[2])
    assert jnp.allclose(a2, ref2["action"], atol=5e-2, rtol=5e-2)

    # ---- direct tiled-kernel test with m / n / k tiling all > 1 ----
    Dd, Md = 256, 24
    counts_d = [40, 200]
    kd = jax.random.split(k_direct, len(counts_d) + 1)
    bound = 1.0 / math.sqrt(Dd)
    wd, bd = [], []
    for i, c in enumerate(counts_d):
        kw, kb = jax.random.split(kd[i])
        wd.append(jax.random.uniform(kw, (Dd, c), jnp.float32, -bound, bound))
        bd.append(jax.random.uniform(kb, (c,), jnp.float32, -bound, bound))
    xd = jax.random.normal(kd[-1], (len(counts_d), Md, Dd), jnp.float32)
    tn_d = 128
    w_cat_d, b_cat_d, head_tbl_d, offs_d = _pack_heads_concat(wd, bd, tn_d)
    out_d = fused_heads_matmul_tiled(xd.astype(jnp.bfloat16), w_cat_d, b_cat_d,
                                     head_tbl_d, tn=tn_d, tm=8, tk=128)
    jax.block_until_ready(out_d)
    for i, c in enumerate(counts_d):
        ref_d = xd[i] @ wd[i] + bd[i]
        got_d = out_d[:, offs_d[i]:offs_d[i] + c]
        assert jnp.allclose(got_d, ref_d, atol=5e-2, rtol=5e-2)

    print("KERNEL_OK")
</pallas_src>

<mosaic_0001>
module attributes {stable_mosaic.version = 11 : i64} {
  func.func @_small_fused_kernel(%arg0: i32, %arg1: memref<3x8x32xbf16, #tpu.memory_space<vmem>>, %arg2: memref<3x32x128xbf16, #tpu.memory_space<vmem>>, %arg3: memref<3x1x128xf32, #tpu.memory_space<vmem>>, %arg4: memref<3x8x128xf32, #tpu.memory_space<vmem>>) attributes {dimension_semantics = [#tpu.dimension_semantics<arbitrary>], iteration_bounds = array<i64: 1>, scalar_prefetch = 0 : i64, scratch_operands = 0 : i64, tpu.core_type = #tpu.core_type<tc>, window_params = [{pipeline_mode = #tpu.pipeline_mode<synchronous>, transform_indices = @transform_0, window_bounds = array<i64: 3, 8, 32>}, {pipeline_mode = #tpu.pipeline_mode<synchronous>, transform_indices = @transform_1, window_bounds = array<i64: 3, 32, 128>}, {pipeline_mode = #tpu.pipeline_mode<synchronous>, transform_indices = @transform_2, window_bounds = array<i64: 3, 1, 128>}, {pipeline_mode = #tpu.pipeline_mode<synchronous>, transform_indices = @transform_3, window_bounds = array<i64: 3, 8, 128>}]} {
    %c0 = arith.constant 0 : index
    %c0_0 = arith.constant 0 : index
    %c0_1 = arith.constant 0 : index
    %0 = vector.load %arg1[%c0, %c0_0, %c0_1] : memref<3x8x32xbf16, #tpu.memory_space<vmem>>, vector<3x8x32xbf16>
    %c0_2 = arith.constant 0 : index
    %c0_3 = arith.constant 0 : index
    %c0_4 = arith.constant 0 : index
    %1 = vector.load %arg2[%c0_2, %c0_3, %c0_4] : memref<3x32x128xbf16, #tpu.memory_space<vmem>>, vector<3x32x128xbf16>
    "tpu.trace_start"() <{level = 10 : i32, message = "hmd,hdc->hmc"}> : () -> ()
    %cst = arith.constant dense<0.000000e+00> : vector<3x8x128xf32>
    %2 = tpu.matmul %0, %1, %cst {dimension_numbers = #tpu.dot_dimension_numbers<[2], [1], [1], [2], [0, 0, 0, 1, 1, 2], [0], [0]>} : vector<3x8x32xbf16>, vector<3x32x128xbf16>, vector<3x8x128xf32> -> vector<3x8x128xf32>
    "tpu.trace_stop"() : () -> ()
    %c0_5 = arith.constant 0 : index
    %c0_6 = arith.constant 0 : index
    %c0_7 = arith.constant 0 : index
    %3 = vector.load %arg3[%c0_5, %c0_6, %c0_7] : memref<3x1x128xf32, #tpu.memory_space<vmem>>, vector<3x1x128xf32>
    %4 = vector.broadcast %3 : vector<3x1x128xf32> to vector<3x8x128xf32>
    %5 = arith.addf %2, %4 : vector<3x8x128xf32>
    %c0_8 = arith.constant 0 : index
    %c0_9 = arith.constant 0 : index
    %c0_10 = arith.constant 0 : index
    %6 = vector.load %arg4[%c0_8, %c0_9, %c0_10] : memref<3x8x128xf32, #tpu.memory_space<vmem>>, vector<3x8x128xf32>
    tpu.vector_store %arg4[%c0_8, %c0_9, %c0_10], %5 {strides = array<i32>} : memref<3x8x128xf32, #tpu.memory_space<vmem>>, vector<3x8x128xf32>,
    return
  }
  func.func @transform_0(%arg0: i32) -> (i32, i32, i32) {
    %c0_i32 = arith.constant 0 : i32
    %c0_i32_0 = arith.constant 0 : i32
    %c0_i32_1 = arith.constant 0 : i32
    %c0_i32_2 = arith.constant 0 : i32
    return %c0_i32, %c0_i32_0, %c0_i32_1 : i32, i32, i32
  }
  func.func @transform_1(%arg0: i32) -> (i32, i32, i32) {
    %c0_i32 = arith.constant 0 : i32
    %c0_i32_0 = arith.constant 0 : i32
    %c0_i32_1 = arith.constant 0 : i32
    %c0_i32_2 = arith.constant 0 : i32
    return %c0_i32, %c0_i32_0, %c0_i32_1 : i32, i32, i32
  }
  func.func @transform_2(%arg0: i32) -> (i32, i32, i32) {
    %c0_i32 = arith.constant 0 : i32
    %c0_i32_0 = arith.constant 0 : i32
    %c0_i32_1 = arith.constant 0 : i32
    %c0_i32_2 = arith.constant 0 : i32
    return %c0_i32, %c0_i32_0, %c0_i32_1 : i32, i32, i32
  }
  func.func @transform_3(%arg0: i32) -> (i32, i32, i32) {
    %c0_i32 = arith.constant 0 : i32
    %c0_i32_0 = arith.constant 0 : i32
    %c0_i32_1 = arith.constant 0 : i32
    %c0_i32_2 = arith.constant 0 : i32
    return %c0_i32, %c0_i32_0, %c0_i32_1 : i32, i32, i32
  }
}

</mosaic_0001>

<llo_original>
// kernel: tpu_custom_call.1
$region0: #{tpu_custom_call.1}
  #allocation0 [shape = 'u32[]', space=smem, size = 0x4, offset = 0x4, fixed_abs, tag = 'smem constant byte address 0x4 - core index']
  #allocation1 [shape = 'u32[144,128]{1,0:T(1,128)}', space=vmem, size = 0x12000, scoped, tag = 'internal scratch']
  %s0 = inlined_call_operand.hbm [shape: bf16[3,8,32], index: 0, kind: input, shape index: {}]
  %s1 = inlined_call_operand.hbm [shape: bf16[3,32,128], index: 1, kind: input, shape index: {}]
  %s2 = inlined_call_operand.vmem [shape: f32[3,1,128], index: 2, kind: input, shape index: {}]
  %s3 = inlined_call_operand.hbm [shape: f32[3,8,128], index: 3, kind: output, shape index: {}]
  %s4 = sld [smem:[#allocation0]]
  $region30: #{tpu_custom_call.1} parent=0
    _
  %s6 = ssub.s32 1, %s4
  %s7 = scalar_select 0, %s6, %s4
  $region1: #{tpu_custom_call.1} parent=0
    #allocation2 [shape = 'u8[6144]{0}', space=vmem, size = 0x1800, scoped, tag = 'input window, operand 0, single buffered']
    #allocation3 [shape = 's32[1]{0}', space=sflag, size = 0x4, scoped, tag = 'scoped memory for tpu_custom_call.1']
    #allocation4 [shape = 's32[1]{0}', space=sflag, size = 0x4, scoped, tag = 'scoped memory for tpu_custom_call.1']
    #allocation5 [shape = 'u8[24576]{0}', space=vmem, size = 0x6000, scoped, tag = 'input window, operand 1, single buffered']
    #allocation6 [shape = 's32[1]{0}', space=sflag, size = 0x4, scoped, tag = 'scoped memory for tpu_custom_call.1']
    #allocation7 [shape = 'u8[12288]{0}', space=vmem, size = 0x3000, scoped, tag = 'output window, operand 0, single buffered']
    %8 = vsyncpa [#allocation3], 0
    %9 = vsyncpa [#allocation6], 0
    %10 = vsyncpa [#allocation4], 0
    // Predicated region
    $region2: #{tpu_custom_call.1} parent=1 // pred_check
      _
    $region3: #{tpu_custom_call.1} parent=1 // pred_check_branch
      %12 = sbr.rel (0) target = $region5
    $region4: #{tpu_custom_call.1} parent=1 // pred_region
      %s14 = ssub.s32 192, 192
      %15 = vsyncadd [#allocation3], %s14
      %s16 = sshll.u32 [#allocation2], 4
      %s17 = int_to_ptr.vmem [resolvable:$true] %s16
      %22 = dma.hbm_to_vmem [thread:$0]  %s0, 192, %s17, [#allocation3], 64, 64, 4
    $region5: #{tpu_custom_call.1} parent=1 // pred_fallthru
      _
    // Predicated region
    $region6: #{tpu_custom_call.1} parent=1 // pred_check
      _
    $region7: #{tpu_custom_call.1} parent=1 // pred_check_branch
      %24 = sbr.rel (0) target = $region9
    $region8: #{tpu_custom_call.1} parent=1 // pred_region
      %s26 = ssub.s32 768, 768
      %27 = vsyncadd [#allocation6], %s26
      %s28 = sshll.u32 [#allocation5], 4
      %s29 = int_to_ptr.vmem [resolvable:$true] %s28
      %34 = dma.hbm_to_vmem [thread:$0]  %s1, 768, %s29, [#allocation6], 64, 64, 4
    $region9: #{tpu_custom_call.1} parent=1 // pred_fallthru
      _
    // Predicated region
    $region10: #{tpu_custom_call.1} parent=1 // pred_check
      _
    $region11: #{tpu_custom_call.1} parent=1 // pred_check_branch
      %36 = sbr.rel (0) target = $region13
    $region12: #{tpu_custom_call.1} parent=1 // pred_region
      _
    $region13: #{tpu_custom_call.1} parent=1 // pred_fallthru
      _
    // Predicated region
    $region14: #{tpu_custom_call.1} parent=1 // pred_check
      _
    $region15: #{tpu_custom_call.1} parent=1 // pred_check_branch
      %38 = sbr.rel (0) target = $region17
    $region16: #{tpu_custom_call.1} parent=1 // pred_region
      %39 = dma.done [#allocation3], 192
    $region17: #{tpu_custom_call.1} parent=1 // pred_fallthru
      _
    // Predicated region
    $region18: #{tpu_custom_call.1} parent=1 // pred_check
      _
    $region19: #{tpu_custom_call.1} parent=1 // pred_check_branch
      %41 = sbr.rel (0) target = $region21
    $region20: #{tpu_custom_call.1} parent=1 // pred_region
      %42 = dma.done [#allocation6], 768
    $region21: #{tpu_custom_call.1} parent=1 // pred_fallthru
      _
    %v44 = vld [vmem:[#allocation2] sm:$0xf]
    %v45 = vld [vmem:[#allocation2 + $0x4] sm:$0xf]
    %v46 = vld [vmem:[#allocation2 + $0x8] sm:$0xf]
    %v47 = vld [vmem:[#allocation5] sm:$0xf]
    %v48 = vld [vmem:[#allocation5 + $0x4] sm:$0xf]
    %v49 = vld [vmem:[#allocation5 + $0x8] sm:$0xf]
    %v50 = vld [vmem:[#allocation5 + $0xc] sm:$0xf]
    %v51 = vld [vmem:[#allocation5 + $0x10] sm:$0xf]
    %v52 = vld [vmem:[#allocation5 + $0x14] sm:$0xf]
    %v53 = vld [vmem:[#allocation5 + $0x18] sm:$0xf]
    %v54 = vld [vmem:[#allocation5 + $0x1c] sm:$0xf]
    %v55 = vld [vmem:[#allocation5 + $0x20] sm:$0xf]
    %v56 = vld [vmem:[#allocation5 + $0x24] sm:$0xf]
    %v57 = vld [vmem:[#allocation5 + $0x28] sm:$0xf]
    %v58 = vld [vmem:[#allocation5 + $0x2c] sm:$0xf]
    %v59 = vld [vmem:[%s2] sm:$0x1]
    %v60 = vld [vmem:[%s2 + $0x1] sm:$0x1]
    %v61 = vld [vmem:[%s2 + $0x2] sm:$0x1]
    %v65 = vlaneseq
    %v66 = vshrl.u32 %v65, 7
    %v67 = vsub.s32 0, %v66
    %v68 = vrot.slane %v59, %v67
    %v69 = vlaneseq
    %v70 = vshrl.u32 %v69, 7
    %v71 = vsub.s32 0, %v70
    %v72 = vrot.slane %v60, %v71
    %v73 = vlaneseq
    %v74 = vshrl.u32 %v73, 7
    %v75 = vsub.s32 0, %v74
    %v76 = vrot.slane %v61, %v75
    %v84 = vunpack.c.l.b16 %v47
    %v85 = vunpack.c.l.b16 %v48
    %v86 = vunpack.c.l.b16 %v49
    %v87 = vunpack.c.l.b16 %v50
    %v88 = vpack.c.b16 %v85, %v84
    %v89 = vpack.c.b16 %v87, %v86
    %vm92 = vcmask 261120
    %v94 = vsel %vm92, %v44, 0
    %96 = vmatprep.subr.bf16.mxu0 0
    %97 = vmatpush1.bf16.msra.mxu0 0
    %98 = vmatprep.subr.bf16.mxu0 0
    %99 = vmatpush1.bf16.msra.mxu0 0
    %100 = vmatprep.subr.bf16.mxu0 0
    %101 = vmatpush1.bf16.msra.mxu0 0
    %102 = vmatprep.subr.bf16.mxu0 0
    %103 = vmatpush1.bf16.msra.mxu0 0
    %104 = vmatprep.subr.bf16.mxu0 0
    %105 = vmatpush1.bf16.msra.mxu0 0
    %106 = vmatprep.subr.bf16.mxu0 0
    %107 = vmatpush1.bf16.msra.mxu0 0
    %108 = vmatprep.subr.bf16.mxu0 0
    %109 = vmatpush1.bf16.msra.mxu0 %v89
    %110 = vmatprep.subr.bf16.mxu0 0
    %111 = vmatpush1.bf16.msra.mxu0 %v88
    %112 = vmatprep.subr.bf16.mxu0 0
    %113 = vmatpush2.bf16.msra.mxu0 0
    %114 = vmatprep.subr.bf16.mxu0 0
    %115 = vmatpush2.bf16.msra.mxu0 0
    %116 = vmatprep.subr.bf16.mxu0 0
    %117 = vmatpush2.bf16.msra.mxu0 0
    %118 = vmatprep.subr.bf16.mxu0 0
    %119 = vmatpush2.bf16.msra.mxu0 0
    %120 = vmatprep.subr.bf16.mxu0 0
    %121 = vmatpush2.bf16.msra.mxu0 0
    %122 = vmatprep.subr.bf16.mxu0 0
    %123 = vmatpush2.bf16.msra.mxu0 0
    %124 = vmatprep.subr.bf16.mxu0 0
    %125 = vmatpush2.bf16.msra.mxu0 0
    %126 = vmatprep.subr.bf16.mxu0 0
    %127 = vmatpush2.bf16.msra.mxu0 0
    %128 = vmatprep.mubr.bf16.mxu0 0
    %129 = vmatmul.mubr.bf16.gmra.mxu0 %v94
    %v130 = vpop.f32.mrf.mxu0
    %v131 = vadd.f32 %v68, %v130
    %v132 = vpop.f32.mrf.mxu0
    %v133 = vpop.f32.mrf.mxu0
    %v134 = vpop.f32.mrf.mxu0
    %135 = vdwg.mxu0
    %v140 = vunpack.c.l.b16 %v51
    %v141 = vunpack.c.l.b16 %v52
    %v142 = vunpack.c.l.b16 %v53
    %v143 = vunpack.c.l.b16 %v54
    %v144 = vpack.c.b16 %v141, %v140
    %v145 = vpack.c.b16 %v143, %v142
    %v149 = vsel %vm92, %v45, 0
    %151 = vmatprep.subr.bf16.mxu0 0
    %152 = vmatpush1.bf16.msra.mxu0 0
    %153 = vmatprep.subr.bf16.mxu0 0
    %154 = vmatpush1.bf16.msra.mxu0 0
    %155 = vmatprep.subr.bf16.mxu0 0
    %156 = vmatpush1.bf16.msra.mxu0 0
    %157 = vmatprep.subr.bf16.mxu0 0
    %158 = vmatpush1.bf16.msra.mxu0 0
    %159 = vmatprep.subr.bf16.mxu0 0
    %160 = vmatpush1.bf16.msra.mxu0 0
    %161 = vmatprep.subr.bf16.mxu0 0
    %162 = vmatpush1.bf16.msra.mxu0 0
    %163 = vmatprep.subr.bf16.mxu0 0
    %164 = vmatpush1.bf16.msra.mxu0 %v145
    %165 = vmatprep.subr.bf16.mxu0 0
    %166 = vmatpush1.bf16.msra.mxu0 %v144
    %167 = vmatprep.subr.bf16.mxu0 0
    %168 = vmatpush2.bf16.msra.mxu0 0
    %169 = vmatprep.subr.bf16.mxu0 0
    %170 = vmatpush2.bf16.msra.mxu0 0
    %171 = vmatprep.subr.bf16.mxu0 0
    %172 = vmatpush2.bf16.msra.mxu0 0
    %173 = vmatprep.subr.bf16.mxu0 0
    %174 = vmatpush2.bf16.msra.mxu0 0
    %175 = vmatprep.subr.bf16.mxu0 0
    %176 = vmatpush2.bf16.msra.mxu0 0
    %177 = vmatprep.subr.bf16.mxu0 0
    %178 = vmatpush2.bf16.msra.mxu0 0
    %179 = vmatprep.subr.bf16.mxu0 0
    %180 = vmatpush2.bf16.msra.mxu0 0
    %181 = vmatprep.subr.bf16.mxu0 0
    %182 = vmatpush2.bf16.msra.mxu0 0
    %183 = vmatprep.mubr.bf16.mxu0 0
    %184 = vmatmul.mubr.bf16.gmra.mxu0 %v149
    %v185 = vpop.f32.mrf.mxu0
    %v186 = vadd.f32 %v72, %v185
    %v187 = vpop.f32.mrf.mxu0
    %v188 = vpop.f32.mrf.mxu0
    %v189 = vpop.f32.mrf.mxu0
    %190 = vdwg.mxu0
    %v195 = vunpack.c.l.b16 %v55
    %v196 = vunpack.c.l.b16 %v56
    %v197 = vunpack.c.l.b16 %v57
    %v198 = vunpack.c.l.b16 %v58
    %v199 = vpack.c.b16 %v196, %v195
    %v200 = vpack.c.b16 %v198, %v197
    %v204 = vsel %vm92, %v46, 0
    %206 = vmatprep.subr.bf16.mxu0 0
    %207 = vmatpush1.bf16.msra.mxu0 0
    %208 = vmatprep.subr.bf16.mxu0 0
    %209 = vmatpush1.bf16.msra.mxu0 0
    %210 = vmatprep.subr.bf16.mxu0 0
    %211 = vmatpush1.bf16.msra.mxu0 0
    %212 = vmatprep.subr.bf16.mxu0 0
    %213 = vmatpush1.bf16.msra.mxu0 0
    %214 = vmatprep.subr.bf16.mxu0 0
    %215 = vmatpush1.bf16.msra.mxu0 0
    %216 = vmatprep.subr.bf16.mxu0 0
    %217 = vmatpush1.bf16.msra.mxu0 0
    %218 = vmatprep.subr.bf16.mxu0 0
    %219 = vmatpush1.bf16.msra.mxu0 %v200
    %220 = vmatprep.subr.bf16.mxu0 0
    %221 = vmatpush1.bf16.msra.mxu0 %v199
    %222 = vmatprep.subr.bf16.mxu0 0
    %223 = vmatpush2.bf16.msra.mxu0 0
    %224 = vmatprep.subr.bf16.mxu0 0
    %225 = vmatpush2.bf16.msra.mxu0 0
    %226 = vmatprep.subr.bf16.mxu0 0
    %227 = vmatpush2.bf16.msra.mxu0 0
    %228 = vmatprep.subr.bf16.mxu0 0
    %229 = vmatpush2.bf16.msra.mxu0 0
    %230 = vmatprep.subr.bf16.mxu0 0
    %231 = vmatpush2.bf16.msra.mxu0 0
    %232 = vmatprep.subr.bf16.mxu0 0
    %233 = vmatpush2.bf16.msra.mxu0 0
    %234 = vmatprep.subr.bf16.mxu0 0
    %235 = vmatpush2.bf16.msra.mxu0 0
    %236 = vmatprep.subr.bf16.mxu0 0
    %237 = vmatpush2.bf16.msra.mxu0 0
    %238 = vmatprep.mubr.bf16.mxu0 0
    %239 = vmatmul.mubr.bf16.gmra.mxu0 %v204
    %v240 = vpop.f32.mrf.mxu0
    %v241 = vadd.f32 %v76, %v240
    %v242 = vpop.f32.mrf.mxu0
    %v243 = vpop.f32.mrf.mxu0
    %v244 = vpop.f32.mrf.mxu0
    %245 = vdwg.mxu0
    %246 = vst [vmem:[#allocation7] sm:$0xff] %v131
    %247 = vst [vmem:[#allocation7 + $0x8] sm:$0xff] %v186
    %248 = vst [vmem:[#allocation7 + $0x10] sm:$0xff] %v241
    // Predicated region
    $region22: #{tpu_custom_call.1} parent=1 // pred_check
      _
    $region23: #{tpu_custom_call.1} parent=1 // pred_check_branch
      %250 = sbr.rel (0) target = $region25
    $region24: #{tpu_custom_call.1} parent=1 // pred_region
      %s252 = ssub.s32 384, 384
      %253 = vsyncadd [#allocation4], %s252
      %s254 = sshll.u32 [#allocation7], 4
      %s255 = int_to_ptr.vmem [resolvable:$true] %s254
      %260 = dma.vmem_to_hbm [thread:$0]  %s255, 384, %s3, [#allocation4], 128, 128, 8
    $region25: #{tpu_custom_call.1} parent=1 // pred_fallthru
      _
    // Predicated region
    $region26: #{tpu_custom_call.1} parent=1 // pred_check
      _
    $region27: #{tpu_custom_call.1} parent=1 // pred_check_branch
      %262 = sbr.rel (0) target = $region29
    $region28: #{tpu_custom_call.1} parent=1 // pred_region
      %263 = dma.done [#allocation4], 384
    $region29: #{tpu_custom_call.1} parent=1 // pred_fallthru
      _
    %264 = vsyncpa [#allocation3], 1
    %265 = vsyncpa [#allocation6], 1
    %266 = vsyncpa [#allocation4], 1

</llo_original>
